<compile_context>
chip_gen: v5e
topology: v5e:2x2
jax: 0.10.0
libtpu: 0.0.40
codegen_flags: <defaults>
</compile_context>

<pallas_src>
import functools

import jax
import jax.numpy as jnp
from jax import lax
from jax.experimental import pallas as pl
from jax.experimental.pallas import tpu as pltpu


def _attention_kernel(xq_ref, k_ref, v_ref, wq_ref, wp_ref, bp_ref, o_ref,
                      ctx_sc, *, num_heads, head_dim):
    # xq_ref : (TQ, C)     query-tile activations (compute dtype, bf16)
    # k_ref  : (H, N, hd)  per-head keys for this batch element
    # v_ref  : (H, N, hd)  per-head values for this batch element
    # wq_ref : (C, C)      Q projection weight, softmax scale pre-folded
    # wp_ref : (C, C)      output projection weight
    # bp_ref : (1, C)      output projection bias (f32)
    # o_ref  : (TQ, C)     output tile
    # ctx_sc : (TQ, C)     VMEM staging for the concatenated per-head contexts
    cdt = ctx_sc.dtype

    # Q projection for all heads at once: one lane-dense C-wide MXU matmul.
    q_all = jnp.dot(xq_ref[...], wq_ref[...],
                    preferred_element_type=jnp.float32).astype(cdt)   # (TQ, C)

    # Static head loop; slices below are static so they lower to simple
    # lane-offset ops.
    for h in range(num_heads):
        lo = h * head_dim
        hi = lo + head_dim
        q_h = q_all[:, lo:hi]                                          # (TQ, hd)

        # q @ k^T without materializing a transpose (contract last dims).
        s = lax.dot_general(q_h, k_ref[h],
                            dimension_numbers=(((1,), (1,)), ((), ())),
                            preferred_element_type=jnp.float32)        # (TQ, N)

        # Softmax kept in f32.  Row-max subtraction also keeps any padded
        # (out-of-bounds) query rows of a partial last tile finite.
        s = s - jnp.max(s, axis=-1, keepdims=True)
        p = jnp.exp(s)
        p = p * pl.reciprocal(jnp.sum(p, axis=-1, keepdims=True), approx=True)

        ctx = jnp.dot(p.astype(cdt), v_ref[h],
                      preferred_element_type=jnp.float32)              # (TQ, hd)
        # Stage this head's context lane-dense at offset h*hd.
        ctx_sc[:, lo:hi] = ctx.astype(cdt)

    # Single C-wide output projection over the concatenated heads + bias.
    out = jnp.dot(ctx_sc[...], wp_ref[...],
                  preferred_element_type=jnp.float32)                  # (TQ, C)
    o_ref[...] = (out + bp_ref[...]).astype(o_ref.dtype)


def attention_pallas(x, w_qkv, w_proj, b_proj, num_heads):
    B, N, C = x.shape
    H = num_heads
    assert C % H == 0, "dim must be divisible by num_heads"
    hd = C // H
    scale = hd ** (-0.5)

    out_dtype = x.dtype
    # bf16 operands into the MXU when x is f32; accumulation stays f32.
    cdt = jnp.bfloat16 if x.dtype == jnp.float32 else x.dtype

    # Softmax scale folded into Wq (in f32, then cast to the compute dtype).
    w_q = (w_qkv[:, :C].astype(jnp.float32) * scale).astype(cdt)       # (C, C)
    w_p = w_proj.astype(cdt)                                           # (C, C)
    b_p = b_proj.astype(jnp.float32).reshape(1, C)

    # K / V projections hoisted out of the kernel: one full-width GEMM in XLA.
    kv = jnp.einsum("bnc,cd->bnd", x, w_qkv[:, C:])                    # (B, N, 2C)
    kv = kv.reshape(B, N, 2, H, hd).astype(cdt)
    k = kv[:, :, 0].transpose(0, 2, 1, 3)                              # (B, H, N, hd)
    v = kv[:, :, 1].transpose(0, 2, 1, 3)                              # (B, H, N, hd)

    x_in = x.astype(cdt)

    # Fixed, aligned query tile; partial last tile handled by cdiv grid.
    TQ = N if N <= 256 else 256
    n_q = pl.cdiv(N, TQ)

    kernel = functools.partial(_attention_kernel, num_heads=H, head_dim=hd)

    return pl.pallas_call(
        kernel,
        out_shape=jax.ShapeDtypeStruct((B, N, C), out_dtype),
        grid=(B, n_q),
        in_specs=[
            pl.BlockSpec((None, TQ, C), lambda b, q: (b, q, 0)),       # x query tile
            pl.BlockSpec((None, H, N, hd), lambda b, q: (b, 0, 0, 0)),  # K
            pl.BlockSpec((None, H, N, hd), lambda b, q: (b, 0, 0, 0)),  # V
            pl.BlockSpec((C, C), lambda b, q: (0, 0)),                  # Wq (scaled)
            pl.BlockSpec((C, C), lambda b, q: (0, 0)),                  # Wproj
            pl.BlockSpec((1, C), lambda b, q: (0, 0)),                  # bias
        ],
        out_specs=pl.BlockSpec((None, TQ, C), lambda b, q: (b, q, 0)),
        scratch_shapes=[
            pltpu.VMEM((TQ, C), cdt),                                   # ctx staging
        ],
        compiler_params=pltpu.CompilerParams(
            # No scratch state carried across grid steps -> both axes parallel
            # (lets v7x use both TensorCores even for B == 1).
            dimension_semantics=("parallel", "parallel"),
            vmem_limit_bytes=32 * 1024 * 1024),
    )(x_in, k, v, w_q, w_p, b_p)


def attention_reference(x, w_qkv, w_proj, b_proj, num_heads):
    """Pure-JAX reference mirroring the PyTorch forward."""
    B, N, C = x.shape
    hd = C // num_heads
    scale = hd ** (-0.5)
    qkv = jnp.einsum("bnc,cd->bnd", x, w_qkv)
    qkv = qkv.reshape(B, N, 3, num_heads, hd).transpose(2, 0, 3, 1, 4)
    q, k, v = qkv[0], qkv[1], qkv[2]                                   # (B, H, N, hd)
    attn = jnp.einsum("bhnd,bhmd->bhnm", q, k) * scale
    attn = jax.nn.softmax(attn, axis=-1)
    out = jnp.einsum("bhnm,bhmd->bhnd", attn, v)
    out = out.transpose(0, 2, 1, 3).reshape(B, N, C)
    return jnp.einsum("bnc,cd->bnd", out, w_proj) + b_proj[0]


if __name__ == "__main__":
    # Small shapes consistent with the module: dim=32, num_heads=4 (head_dim=8).
    B, N, C = 2, 8, 32
    num_heads = 4

    key = jax.random.PRNGKey(0)
    kx, kqkv, kproj, kbias = jax.random.split(key, 4)

    bound = 1.0 / (C ** 0.5)
    x = jax.random.normal(kx, (B, N, C), dtype=jnp.float32)
    w_qkv = jax.random.uniform(kqkv, (C, 3 * C), jnp.float32, -bound, bound)
    w_proj = jax.random.uniform(kproj, (C, C), jnp.float32, -bound, bound)
    b_proj = jax.random.uniform(kbias, (1, C), jnp.float32, -bound, bound)

    out = attention_pallas(x, w_qkv, w_proj, b_proj, num_heads)
    out = jax.block_until_ready(out)

    ref = attention_reference(x, w_qkv, w_proj, b_proj, num_heads)
    assert out.shape == (B, N, C)
    # Tolerance covers bf16 MXU operands + approximate softmax reciprocal.
    assert jnp.allclose(out, ref, rtol=2e-2, atol=2e-2), "mismatch vs reference"

    print("KERNEL_OK")
</pallas_src>

<mosaic_0001>
module attributes {stable_mosaic.version = 11 : i64} {
  func.func @_attention_kernel(%arg0: i32, %arg1: i32, %arg2: memref<1x8x32xbf16, #tpu.memory_space<vmem>>, %arg3: memref<1x4x8x8xbf16, #tpu.memory_space<vmem>>, %arg4: memref<1x4x8x8xbf16, #tpu.memory_space<vmem>>, %arg5: memref<32x32xbf16, #tpu.memory_space<vmem>>, %arg6: memref<32x32xbf16, #tpu.memory_space<vmem>>, %arg7: memref<1x32xf32, #tpu.memory_space<vmem>>, %arg8: memref<1x8x32xf32, #tpu.memory_space<vmem>>, %arg9: memref<8x32xbf16, #tpu.memory_space<vmem>>) attributes {dimension_semantics = [#tpu.dimension_semantics<parallel>, #tpu.dimension_semantics<parallel>], iteration_bounds = array<i64: 2, 1>, scalar_prefetch = 0 : i64, scratch_operands = 1 : i64, tpu.core_type = #tpu.core_type<tc>, window_params = [{transform_indices = @transform_0, window_bounds = array<i64: 1, 8, 32>}, {transform_indices = @transform_1, window_bounds = array<i64: 1, 4, 8, 8>}, {transform_indices = @transform_2, window_bounds = array<i64: 1, 4, 8, 8>}, {pipeline_mode = #tpu.pipeline_mode<synchronous>, transform_indices = @transform_3, window_bounds = array<i64: 32, 32>}, {pipeline_mode = #tpu.pipeline_mode<synchronous>, transform_indices = @transform_4, window_bounds = array<i64: 32, 32>}, {pipeline_mode = #tpu.pipeline_mode<synchronous>, transform_indices = @transform_5, window_bounds = array<i64: 1, 32>}, {transform_indices = @transform_6, window_bounds = array<i64: 1, 8, 32>}]} {
    %c0 = arith.constant 0 : index
    %c0_0 = arith.constant 0 : index
    %c0_1 = arith.constant 0 : index
    %0 = vector.load %arg2[%c0, %c0_0, %c0_1] : memref<1x8x32xbf16, #tpu.memory_space<vmem>>, vector<1x8x32xbf16>
    %1 = vector.shape_cast %0 : vector<1x8x32xbf16> to vector<8x32xbf16>
    %c0_2 = arith.constant 0 : index
    %c0_3 = arith.constant 0 : index
    %2 = vector.load %arg5[%c0_2, %c0_3] : memref<32x32xbf16, #tpu.memory_space<vmem>>, vector<32x32xbf16>
    %cst = arith.constant dense<0.000000e+00> : vector<8x32xf32>
    %3 = tpu.matmul %1, %2, %cst {dimension_numbers = #tpu.dot_dimension_numbers<[1], [0], [0], [1], [0, 0, 1, 1], [], []>} : vector<8x32xbf16>, vector<32x32xbf16>, vector<8x32xf32> -> vector<8x32xf32>
    %4 = arith.truncf %3 : vector<8x32xf32> to vector<8x32xbf16>
    %5 = vector.extract_strided_slice %4 {offsets = [0, 0], sizes = [8, 8], strides = [1, 1]} : vector<8x32xbf16> to vector<8x8xbf16>
    %c0_4 = arith.constant 0 : index
    %c0_5 = arith.constant 0 : index
    %c0_6 = arith.constant 0 : index
    %c0_7 = arith.constant 0 : index
    %6 = vector.load %arg3[%c0_4, %c0_5, %c0_6, %c0_7] : memref<1x4x8x8xbf16, #tpu.memory_space<vmem>>, vector<1x1x8x8xbf16>
    %7 = vector.shape_cast %6 : vector<1x1x8x8xbf16> to vector<8x8xbf16>
    %cst_8 = arith.constant dense<0.000000e+00> : vector<8x8xf32>
    %8 = tpu.matmul %5, %7, %cst_8 {dimension_numbers = #tpu.dot_dimension_numbers<[1], [1], [0], [0], [0, 0, 1, 0], [], []>} : vector<8x8xbf16>, vector<8x8xbf16>, vector<8x8xf32> -> vector<8x8xf32>
    %cst_9 = arith.constant dense<0xFF800000> : vector<8xf32>
    %9 = vector.multi_reduction <maximumf>, %8, %cst_9 [1] : vector<8x8xf32> to vector<8xf32>
    %10 = vector.shape_cast %9 : vector<8xf32> to vector<8x1xf32>
    %11 = vector.broadcast %10 : vector<8x1xf32> to vector<8x8xf32>
    %12 = arith.subf %8, %11 : vector<8x8xf32>
    %13 = math.exp %12 : vector<8x8xf32>
    %cst_10 = arith.constant dense<0.000000e+00> : vector<8xf32>
    %14 = vector.multi_reduction <add>, %13, %cst_10 [1] : vector<8x8xf32> to vector<8xf32>
    %15 = vector.shape_cast %14 : vector<8xf32> to vector<8x1xf32>
    %16 = tpu.reciprocal %15 {approx = true} : vector<8x1xf32> -> vector<8x1xf32>
    %17 = vector.broadcast %16 : vector<8x1xf32> to vector<8x8xf32>
    %18 = arith.mulf %13, %17 : vector<8x8xf32>
    %19 = arith.truncf %18 : vector<8x8xf32> to vector<8x8xbf16>
    %c0_11 = arith.constant 0 : index
    %c0_12 = arith.constant 0 : index
    %c0_13 = arith.constant 0 : index
    %c0_14 = arith.constant 0 : index
    %20 = vector.load %arg4[%c0_11, %c0_12, %c0_13, %c0_14] : memref<1x4x8x8xbf16, #tpu.memory_space<vmem>>, vector<1x1x8x8xbf16>
    %21 = vector.shape_cast %20 : vector<1x1x8x8xbf16> to vector<8x8xbf16>
    %cst_15 = arith.constant dense<0.000000e+00> : vector<8x8xf32>
    %22 = tpu.matmul %19, %21, %cst_15 {dimension_numbers = #tpu.dot_dimension_numbers<[1], [0], [0], [1], [0, 0, 1, 1], [], []>} : vector<8x8xbf16>, vector<8x8xbf16>, vector<8x8xf32> -> vector<8x8xf32>
    %23 = arith.truncf %22 : vector<8x8xf32> to vector<8x8xbf16>
    %c0_16 = arith.constant 0 : index
    %c0_17 = arith.constant 0 : index
    %24 = vector.load %arg9[%c0_16, %c0_17] : memref<8x32xbf16, #tpu.memory_space<vmem>>, vector<8x8xbf16>
    tpu.vector_store %arg9[%c0_16, %c0_17], %23 {strides = array<i32>} : memref<8x32xbf16, #tpu.memory_space<vmem>>, vector<8x8xbf16>,
    %25 = vector.extract_strided_slice %4 {offsets = [0, 8], sizes = [8, 8], strides = [1, 1]} : vector<8x32xbf16> to vector<8x8xbf16>
    %c0_18 = arith.constant 0 : index
    %c1 = arith.constant 1 : index
    %c0_19 = arith.constant 0 : index
    %c0_20 = arith.constant 0 : index
    %26 = vector.load %arg3[%c0_18, %c1, %c0_19, %c0_20] : memref<1x4x8x8xbf16, #tpu.memory_space<vmem>>, vector<1x1x8x8xbf16>
    %27 = vector.shape_cast %26 : vector<1x1x8x8xbf16> to vector<8x8xbf16>
    %cst_21 = arith.constant dense<0.000000e+00> : vector<8x8xf32>
    %28 = tpu.matmul %25, %27, %cst_21 {dimension_numbers = #tpu.dot_dimension_numbers<[1], [1], [0], [0], [0, 0, 1, 0], [], []>} : vector<8x8xbf16>, vector<8x8xbf16>, vector<8x8xf32> -> vector<8x8xf32>
    %cst_22 = arith.constant dense<0xFF800000> : vector<8xf32>
    %29 = vector.multi_reduction <maximumf>, %28, %cst_22 [1] : vector<8x8xf32> to vector<8xf32>
    %30 = vector.shape_cast %29 : vector<8xf32> to vector<8x1xf32>
    %31 = vector.broadcast %30 : vector<8x1xf32> to vector<8x8xf32>
    %32 = arith.subf %28, %31 : vector<8x8xf32>
    %33 = math.exp %32 : vector<8x8xf32>
    %cst_23 = arith.constant dense<0.000000e+00> : vector<8xf32>
    %34 = vector.multi_reduction <add>, %33, %cst_23 [1] : vector<8x8xf32> to vector<8xf32>
    %35 = vector.shape_cast %34 : vector<8xf32> to vector<8x1xf32>
    %36 = tpu.reciprocal %35 {approx = true} : vector<8x1xf32> -> vector<8x1xf32>
    %37 = vector.broadcast %36 : vector<8x1xf32> to vector<8x8xf32>
    %38 = arith.mulf %33, %37 : vector<8x8xf32>
    %39 = arith.truncf %38 : vector<8x8xf32> to vector<8x8xbf16>
    %c0_24 = arith.constant 0 : index
    %c1_25 = arith.constant 1 : index
    %c0_26 = arith.constant 0 : index
    %c0_27 = arith.constant 0 : index
    %40 = vector.load %arg4[%c0_24, %c1_25, %c0_26, %c0_27] : memref<1x4x8x8xbf16, #tpu.memory_space<vmem>>, vector<1x1x8x8xbf16>
    %41 = vector.shape_cast %40 : vector<1x1x8x8xbf16> to vector<8x8xbf16>
    %cst_28 = arith.constant dense<0.000000e+00> : vector<8x8xf32>
    %42 = tpu.matmul %39, %41, %cst_28 {dimension_numbers = #tpu.dot_dimension_numbers<[1], [0], [0], [1], [0, 0, 1, 1], [], []>} : vector<8x8xbf16>, vector<8x8xbf16>, vector<8x8xf32> -> vector<8x8xf32>
    %43 = arith.truncf %42 : vector<8x8xf32> to vector<8x8xbf16>
    %c0_29 = arith.constant 0 : index
    %c8 = arith.constant 8 : index
    %44 = vector.load %arg9[%c0_29, %c8] : memref<8x32xbf16, #tpu.memory_space<vmem>>, vector<8x8xbf16>
    tpu.vector_store %arg9[%c0_29, %c8], %43 {strides = array<i32>} : memref<8x32xbf16, #tpu.memory_space<vmem>>, vector<8x8xbf16>,
    %45 = vector.extract_strided_slice %4 {offsets = [0, 16], sizes = [8, 8], strides = [1, 1]} : vector<8x32xbf16> to vector<8x8xbf16>
    %c0_30 = arith.constant 0 : index
    %c2 = arith.constant 2 : index
    %c0_31 = arith.constant 0 : index
    %c0_32 = arith.constant 0 : index
    %46 = vector.load %arg3[%c0_30, %c2, %c0_31, %c0_32] : memref<1x4x8x8xbf16, #tpu.memory_space<vmem>>, vector<1x1x8x8xbf16>
    %47 = vector.shape_cast %46 : vector<1x1x8x8xbf16> to vector<8x8xbf16>
    %cst_33 = arith.constant dense<0.000000e+00> : vector<8x8xf32>
    %48 = tpu.matmul %45, %47, %cst_33 {dimension_numbers = #tpu.dot_dimension_numbers<[1], [1], [0], [0], [0, 0, 1, 0], [], []>} : vector<8x8xbf16>, vector<8x8xbf16>, vector<8x8xf32> -> vector<8x8xf32>
    %cst_34 = arith.constant dense<0xFF800000> : vector<8xf32>
    %49 = vector.multi_reduction <maximumf>, %48, %cst_34 [1] : vector<8x8xf32> to vector<8xf32>
    %50 = vector.shape_cast %49 : vector<8xf32> to vector<8x1xf32>
    %51 = vector.broadcast %50 : vector<8x1xf32> to vector<8x8xf32>
    %52 = arith.subf %48, %51 : vector<8x8xf32>
    %53 = math.exp %52 : vector<8x8xf32>
    %cst_35 = arith.constant dense<0.000000e+00> : vector<8xf32>
    %54 = vector.multi_reduction <add>, %53, %cst_35 [1] : vector<8x8xf32> to vector<8xf32>
    %55 = vector.shape_cast %54 : vector<8xf32> to vector<8x1xf32>
    %56 = tpu.reciprocal %55 {approx = true} : vector<8x1xf32> -> vector<8x1xf32>
    %57 = vector.broadcast %56 : vector<8x1xf32> to vector<8x8xf32>
    %58 = arith.mulf %53, %57 : vector<8x8xf32>
    %59 = arith.truncf %58 : vector<8x8xf32> to vector<8x8xbf16>
    %c0_36 = arith.constant 0 : index
    %c2_37 = arith.constant 2 : index
    %c0_38 = arith.constant 0 : index
    %c0_39 = arith.constant 0 : index
    %60 = vector.load %arg4[%c0_36, %c2_37, %c0_38, %c0_39] : memref<1x4x8x8xbf16, #tpu.memory_space<vmem>>, vector<1x1x8x8xbf16>
    %61 = vector.shape_cast %60 : vector<1x1x8x8xbf16> to vector<8x8xbf16>
    %cst_40 = arith.constant dense<0.000000e+00> : vector<8x8xf32>
    %62 = tpu.matmul %59, %61, %cst_40 {dimension_numbers = #tpu.dot_dimension_numbers<[1], [0], [0], [1], [0, 0, 1, 1], [], []>} : vector<8x8xbf16>, vector<8x8xbf16>, vector<8x8xf32> -> vector<8x8xf32>
    %63 = arith.truncf %62 : vector<8x8xf32> to vector<8x8xbf16>
    %c0_41 = arith.constant 0 : index
    %c16 = arith.constant 16 : index
    %64 = vector.load %arg9[%c0_41, %c16] : memref<8x32xbf16, #tpu.memory_space<vmem>>, vector<8x8xbf16>
    tpu.vector_store %arg9[%c0_41, %c16], %63 {strides = array<i32>} : memref<8x32xbf16, #tpu.memory_space<vmem>>, vector<8x8xbf16>,
    %65 = vector.extract_strided_slice %4 {offsets = [0, 24], sizes = [8, 8], strides = [1, 1]} : vector<8x32xbf16> to vector<8x8xbf16>
    %c0_42 = arith.constant 0 : index
    %c3 = arith.constant 3 : index
    %c0_43 = arith.constant 0 : index
    %c0_44 = arith.constant 0 : index
    %66 = vector.load %arg3[%c0_42, %c3, %c0_43, %c0_44] : memref<1x4x8x8xbf16, #tpu.memory_space<vmem>>, vector<1x1x8x8xbf16>
    %67 = vector.shape_cast %66 : vector<1x1x8x8xbf16> to vector<8x8xbf16>
    %cst_45 = arith.constant dense<0.000000e+00> : vector<8x8xf32>
    %68 = tpu.matmul %65, %67, %cst_45 {dimension_numbers = #tpu.dot_dimension_numbers<[1], [1], [0], [0], [0, 0, 1, 0], [], []>} : vector<8x8xbf16>, vector<8x8xbf16>, vector<8x8xf32> -> vector<8x8xf32>
    %cst_46 = arith.constant dense<0xFF800000> : vector<8xf32>
    %69 = vector.multi_reduction <maximumf>, %68, %cst_46 [1] : vector<8x8xf32> to vector<8xf32>
    %70 = vector.shape_cast %69 : vector<8xf32> to vector<8x1xf32>
    %71 = vector.broadcast %70 : vector<8x1xf32> to vector<8x8xf32>
    %72 = arith.subf %68, %71 : vector<8x8xf32>
    %73 = math.exp %72 : vector<8x8xf32>
    %cst_47 = arith.constant dense<0.000000e+00> : vector<8xf32>
    %74 = vector.multi_reduction <add>, %73, %cst_47 [1] : vector<8x8xf32> to vector<8xf32>
    %75 = vector.shape_cast %74 : vector<8xf32> to vector<8x1xf32>
    %76 = tpu.reciprocal %75 {approx = true} : vector<8x1xf32> -> vector<8x1xf32>
    %77 = vector.broadcast %76 : vector<8x1xf32> to vector<8x8xf32>
    %78 = arith.mulf %73, %77 : vector<8x8xf32>
    %79 = arith.truncf %78 : vector<8x8xf32> to vector<8x8xbf16>
    %c0_48 = arith.constant 0 : index
    %c3_49 = arith.constant 3 : index
    %c0_50 = arith.constant 0 : index
    %c0_51 = arith.constant 0 : index
    %80 = vector.load %arg4[%c0_48, %c3_49, %c0_50, %c0_51] : memref<1x4x8x8xbf16, #tpu.memory_space<vmem>>, vector<1x1x8x8xbf16>
    %81 = vector.shape_cast %80 : vector<1x1x8x8xbf16> to vector<8x8xbf16>
    %cst_52 = arith.constant dense<0.000000e+00> : vector<8x8xf32>
    %82 = tpu.matmul %79, %81, %cst_52 {dimension_numbers = #tpu.dot_dimension_numbers<[1], [0], [0], [1], [0, 0, 1, 1], [], []>} : vector<8x8xbf16>, vector<8x8xbf16>, vector<8x8xf32> -> vector<8x8xf32>
    %83 = arith.truncf %82 : vector<8x8xf32> to vector<8x8xbf16>
    %c0_53 = arith.constant 0 : index
    %c24 = arith.constant 24 : index
    %84 = vector.load %arg9[%c0_53, %c24] : memref<8x32xbf16, #tpu.memory_space<vmem>>, vector<8x8xbf16>
    tpu.vector_store %arg9[%c0_53, %c24], %83 {strides = array<i32>} : memref<8x32xbf16, #tpu.memory_space<vmem>>, vector<8x8xbf16>,
    %c0_54 = arith.constant 0 : index
    %c0_55 = arith.constant 0 : index
    %85 = vector.load %arg9[%c0_54, %c0_55] : memref<8x32xbf16, #tpu.memory_space<vmem>>, vector<8x32xbf16>
    %c0_56 = arith.constant 0 : index
    %c0_57 = arith.constant 0 : index
    %86 = vector.load %arg6[%c0_56, %c0_57] : memref<32x32xbf16, #tpu.memory_space<vmem>>, vector<32x32xbf16>
    %cst_58 = arith.constant dense<0.000000e+00> : vector<8x32xf32>
    %87 = tpu.matmul %85, %86, %cst_58 {dimension_numbers = #tpu.dot_dimension_numbers<[1], [0], [0], [1], [0, 0, 1, 1], [], []>} : vector<8x32xbf16>, vector<32x32xbf16>, vector<8x32xf32> -> vector<8x32xf32>
    %c0_59 = arith.constant 0 : index
    %c0_60 = arith.constant 0 : index
    %88 = vector.load %arg7[%c0_59, %c0_60] : memref<1x32xf32, #tpu.memory_space<vmem>>, vector<1x32xf32>
    %89 = vector.broadcast %88 : vector<1x32xf32> to vector<8x32xf32>
    %90 = arith.addf %87, %89 : vector<8x32xf32>
    %c0_61 = arith.constant 0 : index
    %c0_62 = arith.constant 0 : index
    %c0_63 = arith.constant 0 : index
    %91 = vector.load %arg8[%c0_61, %c0_62, %c0_63] : memref<1x8x32xf32, #tpu.memory_space<vmem>>, vector<1x8x32xf32>
    %92 = vector.shape_cast %91 : vector<1x8x32xf32> to vector<8x32xf32>
    %93 = vector.shape_cast %90 : vector<8x32xf32> to vector<1x8x32xf32>
    tpu.vector_store %arg8[%c0_61, %c0_62, %c0_63], %93 {strides = array<i32>} : memref<1x8x32xf32, #tpu.memory_space<vmem>>, vector<1x8x32xf32>,
    return
  }
  func.func @transform_0(%arg0: i32, %arg1: i32) -> (i32, i32, i32) {
    %c0_i32 = arith.constant 0 : i32
    %c0_i32_0 = arith.constant 0 : i32
    return %arg0, %arg1, %c0_i32 : i32, i32, i32
  }
  func.func @transform_1(%arg0: i32, %arg1: i32) -> (i32, i32, i32, i32) {
    %c0_i32 = arith.constant 0 : i32
    %c0_i32_0 = arith.constant 0 : i32
    %c0_i32_1 = arith.constant 0 : i32
    %c0_i32_2 = arith.constant 0 : i32
    return %arg0, %c0_i32, %c0_i32_0, %c0_i32_1 : i32, i32, i32, i32
  }
  func.func @transform_2(%arg0: i32, %arg1: i32) -> (i32, i32, i32, i32) {
    %c0_i32 = arith.constant 0 : i32
    %c0_i32_0 = arith.constant 0 : i32
    %c0_i32_1 = arith.constant 0 : i32
    %c0_i32_2 = arith.constant 0 : i32
    return %arg0, %c0_i32, %c0_i32_0, %c0_i32_1 : i32, i32, i32, i32
  }
  func.func @transform_3(%arg0: i32, %arg1: i32) -> (i32, i32) {
    %c0_i32 = arith.constant 0 : i32
    %c0_i32_0 = arith.constant 0 : i32
    %c0_i32_1 = arith.constant 0 : i32
    return %c0_i32, %c0_i32_0 : i32, i32
  }
  func.func @transform_4(%arg0: i32, %arg1: i32) -> (i32, i32) {
    %c0_i32 = arith.constant 0 : i32
    %c0_i32_0 = arith.constant 0 : i32
    %c0_i32_1 = arith.constant 0 : i32
    return %c0_i32, %c0_i32_0 : i32, i32
  }
  func.func @transform_5(%arg0: i32, %arg1: i32) -> (i32, i32) {
    %c0_i32 = arith.constant 0 : i32
    %c0_i32_0 = arith.constant 0 : i32
    %c0_i32_1 = arith.constant 0 : i32
    return %c0_i32, %c0_i32_0 : i32, i32
  }
  func.func @transform_6(%arg0: i32, %arg1: i32) -> (i32, i32, i32) {
    %c0_i32 = arith.constant 0 : i32
    %c0_i32_0 = arith.constant 0 : i32
    return %arg0, %arg1, %c0_i32 : i32, i32, i32
  }
}

</mosaic_0001>

<llo_original>
// kernel: tpu_custom_call.1
$region0: #{tpu_custom_call.1}
  #allocation0 [shape = 'u32[]', space=smem, size = 0x4, offset = 0x4, fixed_abs, tag = 'smem constant byte address 0x4 - core index']
  #allocation1 [shape = 'u32[72,128]{1,0:T(1,128)}', space=vmem, size = 0x9000, scoped, tag = 'internal scratch']
  #allocation2 [shape = 'bf16[8,32]{1,0:T(8,128)(2,1)}', space=vmem, size = 0x800, scoped, tag = 'scratch operand']
  %s0 = inlined_call_operand.hbm [shape: bf16[2,8,32], index: 0, kind: input, shape index: {}]
  %s1 = inlined_call_operand.hbm [shape: bf16[2,4,8,8], index: 1, kind: input, shape index: {}]
  %s2 = inlined_call_operand.hbm [shape: bf16[2,4,8,8], index: 2, kind: input, shape index: {}]
  %s3 = inlined_call_operand.hbm [shape: bf16[32,32], index: 3, kind: input, shape index: {}]
  %s4 = inlined_call_operand.hbm [shape: bf16[32,32], index: 4, kind: input, shape index: {}]
  %s5 = inlined_call_operand.vmem [shape: f32[1,32], index: 5, kind: input, shape index: {}]
  %s6 = inlined_call_operand.hbm [shape: f32[2,8,32], index: 6, kind: output, shape index: {}]
  %s7 = sld [smem:[#allocation0]]
  $region77: #{tpu_custom_call.1} parent=0
    _
  %s9 = ssub.s32 1, %s7
  %s10 = scalar_select 0, %s9, %s7
  $region1: #{tpu_custom_call.1} parent=0
    #allocation3 [shape = 'u8[4096]{0}', space=vmem, size = 0x1000, scoped, tag = 'input window, operand 0']
    #allocation4 [shape = 's32[2]{0}', space=sflag, size = 0x8, scoped, tag = 'scoped memory for tpu_custom_call.1']
    #allocation5 [shape = 's32[2]{0}', space=sflag, size = 0x8, scoped, tag = 'scoped memory for tpu_custom_call.1']
    #allocation6 [shape = 'u8[16384]{0}', space=vmem, size = 0x4000, scoped, tag = 'input window, operand 1']
    #allocation7 [shape = 's32[2]{0}', space=sflag, size = 0x8, scoped, tag = 'scoped memory for tpu_custom_call.1']
    #allocation8 [shape = 'u8[16384]{0}', space=vmem, size = 0x4000, scoped, tag = 'input window, operand 2']
    #allocation9 [shape = 'u8[8192]{0}', space=vmem, size = 0x2000, scoped, tag = 'input window, operand 3, single buffered']
    #allocation10 [shape = 's32[1]{0}', space=sflag, size = 0x4, scoped, tag = 'scoped memory for tpu_custom_call.1']
    #allocation11 [shape = 'u8[8192]{0}', space=vmem, size = 0x2000, scoped, tag = 'input window, operand 4, single buffered']
    #allocation12 [shape = 'u8[8192]{0}', space=vmem, size = 0x2000, scoped, tag = 'output window, operand 0']
    %11 = vsyncpa [#allocation4], 0
    %s12 = scalar_lea.sflag [#allocation4], 1
    %13 = vsyncpa %s12, 0
    %14 = vsyncpa [#allocation7], 0
    %s15 = scalar_lea.sflag [#allocation7], 1
    %16 = vsyncpa %s15, 0
    %17 = vsyncpa [#allocation10], 0
    %18 = vsyncpa [#allocation5], 0
    %s19 = scalar_lea.sflag [#allocation5], 1
    %20 = vsyncpa %s19, 0
    loop: start=0, step=1, limit=4
    $region2: #{tpu_custom_call.1} parent=1 // loop_pre_header
      _
    $region3: #{tpu_custom_call.1} parent=1 // loop_header
      %s22 = sphi 0, %s26
      %p23 = scmp.ge.s32.totalorder %s22, 4
      %s29 = sphi 0, %s41
      %s30 = sphi 0, %s37
      %s31 = sphi 0, %s29
      %s32 = sphi 0, %s30
      %s33 = sphi 0, %s31
      %s34 = sphi 0, %s32
      %s46 = sphi 0, %s48
      %s49 = sphi 0, %s46
      %s50 = sphi 0, %s49
      %s66 = sphi 0, %s50
      %s72 = sphi 0, %s74
      %s75 = sphi 0, %s72
      %s76 = sphi 0, %s75
      %s92 = sphi 0, %s76
      %s98 = sphi 0, %s100
      %s101 = sphi 0, %s98
      %s102 = sphi 0, %s101
      %s118 = sphi 0, %s102
      %s122 = sphi 0, %s122
      %s124 = sphi 0, %s122
      %s125 = sphi 0, %s124
      %s139 = sphi 0, %s125
      %s143 = sphi 0, %s143
      %s145 = sphi 0, %s143
      %s146 = sphi 0, %s145
      %s160 = sphi 0, %s146
      %s164 = sphi 0, %s164
      %s166 = sphi 0, %s164
      %s167 = sphi 0, %s166
      %s181 = sphi 0, %s167
      %s189 = sphi 0, %s191
      %s192 = sphi 0, %s189
      %s193 = sphi 0, %s192
      %s209 = sphi 0, %s193
    $region4: #{tpu_custom_call.1} parent=1 // loop_header_branch
      %25 = sbr.rel (%p23) target = $region8
    $region5: #{tpu_custom_call.1} parent=1 // loop_body
      %s27 = ssub.s32 %s22, 1
      %s28 = ssub.s32 %s22, 2
      %s35 = sadd.s32 1, %s30
      %p36 = scmp.ge.s32.totalorder %s35, 1
      %s37 = scalar_select %p36, 0, %s35
      %s38 = sadd.s32 1, %s29
      %s39 = scalar_select %p36, %s38, %s29
      %p40 = scmp.ge.s32.totalorder %s39, 2
      %s41 = scalar_select %p40, 0, %s39
      %s42 = ssub.s32 %s29, %s41
      %s43 = ssub.s32 %s30, %s37
      %s44 = sor.u32 %s42, %s43
      %p45 = scmp.eq.s32.totalorder %s44, 0
      %s47 = sadd.s32 %s46, 1
      %s48 = scalar_select %p45, %s46, %s47
      %p51 = pneg %p45
      %p52 = scmp.eq.s32.totalorder %s22, 1
      %p53 = por %p51, %p52
      %p54 = scmp.ne.s32.totalorder %s46, %s49
      %p55 = scmp.eq.s32.totalorder %s22, 0
      %p56 = por %p54, %p55
      %p57 = scmp.ne.s32.totalorder %s46, %s49
      %p58 = scmp.eq.s32.totalorder %s27, 1
      %p59 = por %p57, %p58
      %p60 = scmp.ne.s32.totalorder %s49, %s50
      %p61 = scmp.eq.s32.totalorder %s27, 0
      %p62 = por %p60, %p61
      %p63 = scmp.ne.s32.totalorder %s49, %s50
      %p64 = scmp.eq.s32.totalorder %s28, 1
      %p65 = por %p63, %p64
      %p67 = scmp.ne.s32.totalorder %s50, %s66
      %p68 = scmp.eq.s32.totalorder %s28, 0
      %p69 = por %p67, %p68
      %s70 = ssub.s32 %s29, %s41
      %p71 = scmp.eq.s32.totalorder %s70, 0
      %s73 = sadd.s32 %s72, 1
      %s74 = scalar_select %p71, %s72, %s73
      %p77 = pneg %p71
      %p78 = scmp.eq.s32.totalorder %s22, 1
      %p79 = por %p77, %p78
      %p80 = scmp.ne.s32.totalorder %s72, %s75
      %p81 = scmp.eq.s32.totalorder %s22, 0
      %p82 = por %p80, %p81
      %p83 = scmp.ne.s32.totalorder %s72, %s75
      %p84 = scmp.eq.s32.totalorder %s27, 1
      %p85 = por %p83, %p84
      %p86 = scmp.ne.s32.totalorder %s75, %s76
      %p87 = scmp.eq.s32.totalorder %s27, 0
      %p88 = por %p86, %p87
      %p89 = scmp.ne.s32.totalorder %s75, %s76
      %p90 = scmp.eq.s32.totalorder %s28, 1
      %p91 = por %p89, %p90
      %p93 = scmp.ne.s32.totalorder %s76, %s92
      %p94 = scmp.eq.s32.totalorder %s28, 0
      %p95 = por %p93, %p94
      %s96 = ssub.s32 %s29, %s41
      %p97 = scmp.eq.s32.totalorder %s96, 0
      %s99 = sadd.s32 %s98, 1
      %s100 = scalar_select %p97, %s98, %s99
      %p103 = pneg %p97
      %p104 = scmp.eq.s32.totalorder %s22, 1
      %p105 = por %p103, %p104
      %p106 = scmp.ne.s32.totalorder %s98, %s101
      %p107 = scmp.eq.s32.totalorder %s22, 0
      %p108 = por %p106, %p107
      %p109 = scmp.ne.s32.totalorder %s98, %s101
      %p110 = scmp.eq.s32.totalorder %s27, 1
      %p111 = por %p109, %p110
      %p112 = scmp.ne.s32.totalorder %s101, %s102
      %p113 = scmp.eq.s32.totalorder %s27, 0
      %p114 = por %p112, %p113
      %p115 = scmp.ne.s32.totalorder %s101, %s102
      %p116 = scmp.eq.s32.totalorder %s28, 1
      %p117 = por %p115, %p116
      %p119 = scmp.ne.s32.totalorder %s102, %s118
      %p120 = scmp.eq.s32.totalorder %s28, 0
      %p121 = por %p119, %p120
      %s123 = sadd.s32 %s122, 1
      %p126 = scmp.eq.s32.totalorder %s22, 1
      %p127 = scmp.ne.s32.totalorder %s122, %s124
      %p128 = scmp.eq.s32.totalorder %s22, 0
      %p129 = por %p127, %p128
      %p130 = scmp.ne.s32.totalorder %s122, %s124
      %p131 = scmp.eq.s32.totalorder %s27, 1
      %p132 = por %p130, %p131
      %p133 = scmp.ne.s32.totalorder %s124, %s125
      %p134 = scmp.eq.s32.totalorder %s27, 0
      %p135 = por %p133, %p134
      %p136 = scmp.ne.s32.totalorder %s124, %s125
      %p137 = scmp.eq.s32.totalorder %s28, 1
      %p138 = por %p136, %p137
      %p140 = scmp.ne.s32.totalorder %s125, %s139
      %p141 = scmp.eq.s32.totalorder %s28, 0
      %p142 = por %p140, %p141
      %s144 = sadd.s32 %s143, 1
      %p147 = scmp.eq.s32.totalorder %s22, 1
      %p148 = scmp.ne.s32.totalorder %s143, %s145
      %p149 = scmp.eq.s32.totalorder %s22, 0
      %p150 = por %p148, %p149
      %p151 = scmp.ne.s32.totalorder %s143, %s145
      %p152 = scmp.eq.s32.totalorder %s27, 1
      %p153 = por %p151, %p152
      %p154 = scmp.ne.s32.totalorder %s145, %s146
      %p155 = scmp.eq.s32.totalorder %s27, 0
      %p156 = por %p154, %p155
      %p157 = scmp.ne.s32.totalorder %s145, %s146
      %p158 = scmp.eq.s32.totalorder %s28, 1
      %p159 = por %p157, %p158
      %p161 = scmp.ne.s32.totalorder %s146, %s160
      %p162 = scmp.eq.s32.totalorder %s28, 0
      %p163 = por %p161, %p162
      %s165 = sadd.s32 %s164, 1
      %p168 = scmp.eq.s32.totalorder %s22, 1
      %p169 = scmp.ne.s32.totalorder %s164, %s166
      %p170 = scmp.eq.s32.totalorder %s22, 0
      %p171 = por %p169, %p170
      %p172 = scmp.ne.s32.totalorder %s164, %s166
      %p173 = scmp.eq.s32.totalorder %s27, 1
      %p174 = por %p172, %p173
      %p175 = scmp.ne.s32.totalorder %s166, %s167
      %p176 = scmp.eq.s32.totalorder %s27, 0
      %p177 = por %p175, %p176
      %p178 = scmp.ne.s32.totalorder %s166, %s167
      %p179 = scmp.eq.s32.totalorder %s28, 1
      %p180 = por %p178, %p179
      %p182 = scmp.ne.s32.totalorder %s167, %s181
      %p183 = scmp.eq.s32.totalorder %s28, 0
      %p184 = por %p182, %p183
      %s185 = ssub.s32 %s29, %s41
      %s186 = ssub.s32 %s30, %s37
      %s187 = sor.u32 %s185, %s186
      %p188 = scmp.eq.s32.totalorder %s187, 0
      %s190 = sadd.s32 %s189, 1
      %s191 = scalar_select %p188, %s189, %s190
      %p194 = pneg %p188
      %p195 = scmp.eq.s32.totalorder %s22, 1
      %p196 = por %p194, %p195
      %p197 = scmp.ne.s32.totalorder %s189, %s192
      %p198 = scmp.eq.s32.totalorder %s22, 0
      %p199 = por %p197, %p198
      %p200 = scmp.ne.s32.totalorder %s189, %s192
      %p201 = scmp.eq.s32.totalorder %s27, 1
      %p202 = por %p200, %p201
      %p203 = scmp.ne.s32.totalorder %s192, %s193
      %p204 = scmp.eq.s32.totalorder %s27, 0
      %p205 = por %p203, %p204
      %p206 = scmp.ne.s32.totalorder %s192, %s193
      %p207 = scmp.eq.s32.totalorder %s28, 1
      %p208 = por %p206, %p207
      %p210 = scmp.ne.s32.totalorder %s193, %s209
      %p211 = scmp.eq.s32.totalorder %s28, 0
      %p212 = por %p210, %p211
      %p213 = scmp.le.s32.totalorder 1, %s22
      %p214 = scmp.lt.s32.totalorder %s22, 3
      %p215 = pnand %p213, %p214
      %p216 = pneg %p215
      // Predicated region
      $region9: #{tpu_custom_call.1} parent=5 // pred_check
        _
      $region10: #{tpu_custom_call.1} parent=5 // pred_check_branch
        %218 = sbr.rel (%p215) target = $region12
      $region11: #{tpu_custom_call.1} parent=5 // pred_region
        %s219 = ssub.s32 %s22, 1
        // Predicated region
        $region13: #{tpu_custom_call.1} parent=11 // pred_check
          %p220 = pneg %p135
        $region14: #{tpu_custom_call.1} parent=11 // pred_check_branch
          %222 = sbr.rel (%p220) target = $region16
        $region15: #{tpu_custom_call.1} parent=11 // pred_region
          %224 = vsyncadd [#allocation10], 0
          %s225 = sshll.u32 %s3, 4
          %s226 = int_to_ptr.hbm [resolvable:$true] %s225
          %s227 = sshll.u32 [#allocation9], 4
          %s228 = int_to_ptr.vmem [resolvable:$true] %s227
          %233 = dma.hbm_to_vmem [thread:$0]  %s226, 256, %s228, [#allocation10], 64, 64, 4
        $region16: #{tpu_custom_call.1} parent=11 // pred_fallthru
          _
        // Predicated region
        $region17: #{tpu_custom_call.1} parent=11 // pred_check
          %p234 = pneg %p156
        $region18: #{tpu_custom_call.1} parent=11 // pred_check_branch
          %236 = sbr.rel (%p234) target = $region20
        $region19: #{tpu_custom_call.1} parent=11 // pred_region
          %238 = vsyncadd [#allocation10], 0
          %s239 = sshll.u32 %s4, 4
          %s240 = int_to_ptr.hbm [resolvable:$true] %s239
          %s241 = sshll.u32 [#allocation11], 4
          %s242 = int_to_ptr.vmem [resolvable:$true] %s241
          %247 = dma.hbm_to_vmem [thread:$0]  %s240, 256, %s242, [#allocation10], 64, 64, 4
        $region20: #{tpu_custom_call.1} parent=11 // pred_fallthru
          _
        // Predicated region
        $region21: #{tpu_custom_call.1} parent=11 // pred_check
          %p248 = pneg %p177
        $region22: #{tpu_custom_call.1} parent=11 // pred_check_branch
          %250 = sbr.rel (%p248) target = $region24
        $region23: #{tpu_custom_call.1} parent=11 // pred_region
          _
        $region24: #{tpu_custom_call.1} parent=11 // pred_fallthru
          _
      $region12: #{tpu_custom_call.1} parent=5 // pred_fallthru
        _
      %p251 = scmp.lt.s32.totalorder %s22, 2
      // Predicated region
      $region25: #{tpu_custom_call.1} parent=5 // pred_check
        %p252 = pneg %p251
      $region26: #{tpu_custom_call.1} parent=5 // pred_check_branch
        %254 = sbr.rel (%p252) target = $region28
      $region27: #{tpu_custom_call.1} parent=5 // pred_region
        // Predicated region
        $region29: #{tpu_custom_call.1} parent=27 // pred_check
          %p255 = pneg %p56
        $region30: #{tpu_custom_call.1} parent=27 // pred_check_branch
          %257 = sbr.rel (%p255) target = $region32
        $region31: #{tpu_custom_call.1} parent=27 // pred_region
          %s258 = sand.u32 %s46, 1
          %s259 = scalar_lea.sflag [#allocation4], %s258
          %s260 = sand.u32 %s46, 1
          %s261 = smul.addr %s260, 4
          %s262 = scalar_lea.vmem [#allocation3], %s261
          %264 = vsyncadd %s259, 0
          %s265 = sadd.s32 %s30, %s29
          %s266 = smul.addr %s265, 4
          %s267 = scalar_lea.hbm %s0, %s266
          %s269 = sshll.u32 %s267, 4
          %s270 = int_to_ptr.hbm [resolvable:$true] %s269
          %s271 = sshll.u32 %s262, 4
          %s272 = int_to_ptr.vmem [resolvable:$true] %s271
          %274 = dma.hbm_to_vmem [thread:$0]  %s270, 64, %s272, %s259
        $region32: #{tpu_custom_call.1} parent=27 // pred_fallthru
          _
        // Predicated region
        $region33: #{tpu_custom_call.1} parent=27 // pred_check
          %p275 = pneg %p82
        $region34: #{tpu_custom_call.1} parent=27 // pred_check_branch
          %277 = sbr.rel (%p275) target = $region36
        $region35: #{tpu_custom_call.1} parent=27 // pred_region
          %s278 = sand.u32 %s22, 1
          %s279 = scalar_lea.sflag [#allocation7], %s278
          %s280 = sand.u32 %s72, 1
          %s281 = smul.addr %s280, 16
          %s282 = scalar_lea.vmem [#allocation6], %s281
          %284 = vsyncadd %s279, 0
          %s285 = smul.addr %s29, 4
          %s286 = smul.addr %s285, 4
          %s287 = scalar_lea.hbm %s1, %s286
          %s288 = sshll.u32 %s287, 4
          %s289 = int_to_ptr.hbm [resolvable:$true] %s288
          %s290 = sshll.u32 %s282, 4
          %s291 = int_to_ptr.vmem [resolvable:$true] %s290
          %296 = dma.hbm_to_vmem [thread:$0]  %s289, 256, %s291, %s279, 64, 64, 4
        $region36: #{tpu_custom_call.1} parent=27 // pred_fallthru
          _
        // Predicated region
        $region37: #{tpu_custom_call.1} parent=27 // pred_check
          %p297 = pneg %p108
        $region38: #{tpu_custom_call.1} parent=27 // pred_check_branch
          %299 = sbr.rel (%p297) target = $region40
        $region39: #{tpu_custom_call.1} parent=27 // pred_region
          %s300 = sand.u32 %s22, 1
          %s301 = scalar_lea.sflag [#allocation7], %s300
          %s302 = sand.u32 %s98, 1
          %s303 = smul.addr %s302, 16
          %s304 = scalar_lea.vmem [#allocation8], %s303
          %306 = vsyncadd %s301, 0
          %s307 = smul.addr %s29, 4
          %s308 = smul.addr %s307, 4
          %s309 = scalar_lea.hbm %s2, %s308
          %s310 = sshll.u32 %s309, 4
          %s311 = int_to_ptr.hbm [resolvable:$true] %s310
          %s312 = sshll.u32 %s304, 4
          %s313 = int_to_ptr.vmem [resolvable:$true] %s312
          %318 = dma.hbm_to_vmem [thread:$0]  %s311, 256, %s313, %s301, 64, 64, 4
        $region40: #{tpu_custom_call.1} parent=27 // pred_fallthru
          _
      $region28: #{tpu_custom_call.1} parent=5 // pred_fallthru
        _
      %p319 = scmp.le.s32.totalorder 1, %s22
      %p320 = scmp.lt.s32.totalorder %s22, 3
      %p321 = pnand %p319, %p320
      %p322 = pneg %p321
      // Predicated region
      $region41: #{tpu_custom_call.1} parent=5 // pred_check
        _
      $region42: #{tpu_custom_call.1} parent=5 // pred_check_branch
        %324 = sbr.rel (%p321) target = $region44
      $region43: #{tpu_custom_call.1} parent=5 // pred_region
        %s325 = ssub.s32 %s22, 1
        %s326 = sand.u32 %s49, 1
        %s327 = scalar_lea.sflag [#allocation4], %s326
        %s328 = sand.u32 %s49, 1
        %s329 = smul.addr %s328, 4
        %s330 = scalar_lea.vmem [#allocation3], %s329
        // Predicated region
        $region45: #{tpu_custom_call.1} parent=43 // pred_check
          %p331 = pneg %p62
        $region46: #{tpu_custom_call.1} parent=43 // pred_check_branch
          %333 = sbr.rel (%p331) target = $region48
        $region47: #{tpu_custom_call.1} parent=43 // pred_region
          %335 = dma.done %s327, 64
        $region48: #{tpu_custom_call.1} parent=43 // pred_fallthru
          _
        %s336 = sand.u32 %s27, 1
        %s337 = scalar_lea.sflag [#allocation7], %s336
        %s338 = sand.u32 %s75, 1
        %s339 = smul.addr %s338, 16
        %s340 = scalar_lea.vmem [#allocation6], %s339
        // Predicated region
        $region49: #{tpu_custom_call.1} parent=43 // pred_check
          %p341 = pneg %p88
        $region50: #{tpu_custom_call.1} parent=43 // pred_check_branch
          %343 = sbr.rel (%p341) target = $region52
        $region51: #{tpu_custom_call.1} parent=43 // pred_region
          %345 = dma.done %s337, 256
        $region52: #{tpu_custom_call.1} parent=43 // pred_fallthru
          _
        %s346 = sand.u32 %s27, 1
        %s347 = scalar_lea.sflag [#allocation7], %s346
        %s348 = sand.u32 %s101, 1
        %s349 = smul.addr %s348, 16
        %s350 = scalar_lea.vmem [#allocation8], %s349
        // Predicated region
        $region53: #{tpu_custom_call.1} parent=43 // pred_check
          %p351 = pneg %p114
        $region54: #{tpu_custom_call.1} parent=43 // pred_check_branch
          %353 = sbr.rel (%p351) target = $region56
        $region55: #{tpu_custom_call.1} parent=43 // pred_region
          %355 = dma.done %s347, 256
        $region56: #{tpu_custom_call.1} parent=43 // pred_fallthru
          _
        // Predicated region
        $region57: #{tpu_custom_call.1} parent=43 // pred_check
          %p356 = pneg %p135
        $region58: #{tpu_custom_call.1} parent=43 // pred_check_branch
          %358 = sbr.rel (%p356) target = $region60
        $region59: #{tpu_custom_call.1} parent=43 // pred_region
          %360 = dma.done [#allocation10], 256
        $region60: #{tpu_custom_call.1} parent=43 // pred_fallthru
          _
        // Predicated region
        $region61: #{tpu_custom_call.1} parent=43 // pred_check
          %p361 = pneg %p156
        $region62: #{tpu_custom_call.1} parent=43 // pred_check_branch
          %363 = sbr.rel (%p361) target = $region64
        $region63: #{tpu_custom_call.1} parent=43 // pred_region
          %365 = dma.done [#allocation10], 256
        $region64: #{tpu_custom_call.1} parent=43 // pred_fallthru
          _
        %s366 = sand.u32 %s49, 1
        %s367 = scalar_lea.sflag [#allocation4], %s366
        %s368 = sand.u32 %s49, 1
        %s369 = smul.addr %s368, 4
        %s370 = scalar_lea.vmem [#allocation3], %s369
        %p371 = pneg %p62
        %p372 = pneg %p59
        %s373 = sand.u32 %s27, 1
        %s374 = scalar_lea.sflag [#allocation7], %s373
        %s375 = sand.u32 %s75, 1
        %s376 = smul.addr %s375, 16
        %s377 = scalar_lea.vmem [#allocation6], %s376
        %p378 = pneg %p88
        %p379 = pneg %p85
        %s380 = sand.u32 %s27, 1
        %s381 = scalar_lea.sflag [#allocation7], %s380
        %s382 = sand.u32 %s101, 1
        %s383 = smul.addr %s382, 16
        %s384 = scalar_lea.vmem [#allocation8], %s383
        %p385 = pneg %p114
        %p386 = pneg %p111
        %p387 = pneg %p135
        %p388 = pneg %p132
        %p389 = pneg %p156
        %p390 = pneg %p153
        %p391 = pneg %p177
        %p392 = pneg %p174
        %p393 = pneg %p205
        %p394 = pneg %p202
        %s395 = sand.u32 %s192, 1
        %s396 = scalar_lea.sflag [#allocation5], %s395
        %s397 = sand.u32 %s192, 1
        %s398 = smul.addr %s397, 8
        %s399 = scalar_lea.vmem [#allocation12], %s398
        %v401 = vld [vmem:[%s330] sm:$0xf]
        %v402 = vld [vmem:[#allocation9] sm:$0xf]
        %v403 = vld [vmem:[#allocation9 + $0x4] sm:$0xf]
        %v404 = vld [vmem:[#allocation9 + $0x8] sm:$0xf]
        %v405 = vld [vmem:[#allocation9 + $0xc] sm:$0xf]
        %v410 = vunpack.c.l.b16 %v402
        %v411 = vunpack.c.l.b16 %v403
        %v412 = vunpack.c.l.b16 %v404
        %v413 = vunpack.c.l.b16 %v405
        %v414 = vpack.c.b16 %v411, %v410
        %v415 = vpack.c.b16 %v413, %v412
        %vm418 = vcmask 261120
        %v420 = vsel %vm418, %v401, 0
        %422 = vmatpush.bf16.msra.mxu0 0
        %423 = vmatpush.bf16.msra.mxu0 0
        %424 = vmatpush.bf16.msra.mxu0 0
        %425 = vmatpush.bf16.msra.mxu0 0
        %426 = vmatpush.bf16.msra.mxu0 0
        %427 = vmatpush.bf16.msra.mxu0 0
        %428 = vmatpush.bf16.msra.mxu0 %v415
        %429 = vmatpush.bf16.msra.mxu0 %v414
        %430 = vmatmul.bf16.gmra.mxu0 %v420
        %v431 = vpop.f32.mrf.mxu0
        %v432 = vadd.f32 0.0, %v431
        %v433 = vpop.f32.mrf.mxu0
        %434 = vdwg.mxu0
        %v435 = vpack.c.bf16 %v432, %v432
        %v436 = vld [vmem:[%s340] sm:$0xf]
        %vm437 = vcmask 64512
        %v439 = vsel %vm437, %v435, 0
        %v442 = vsel %vm437, %v436, 0
        %444 = vmatpush.bf16.xpose.msra.mxu0 0
        %445 = vmatpush.bf16.xpose.msra.mxu0 0
        %446 = vmatpush.bf16.xpose.msra.mxu0 0
        %447 = vmatpush.bf16.xpose.msra.mxu0 0
        %448 = vmatpush.bf16.xpose.msra.mxu0 0
        %449 = vmatpush.bf16.xpose.msra.mxu0 0
        %450 = vmatpush.bf16.xpose.msra.mxu0 0
        %451 = vmatpush.bf16.xpose.msra.mxu0 %v442
        %452 = vmatmul.bf16.gmra.mxu0 %v439
        %v453 = vpop.f32.mrf.mxu0
        %v454 = vadd.f32 0.0, %v453
        %v455 = vpop.f32.mrf.mxu0
        %456 = vdwg.mxu0
        %v457 = vsel %vm437, %v454, -inf
        %458 = vmax.xlane.f32.xlu0 %v457
        %v459 = vpop.xlane.xlu0 %458
        %v460 = vsub.f32 %v454, %v459
        %v461 = vmul.f32 %v460, 1.442695
        %v462 = vpow.pop %v461
        %v463 = vsel %vm437, %v462, 0.0
        %464 = vadd.xlane.f32.xlu0 %v463
        %v465 = vpop.xlane.xlu0 %464
        %v466 = vrcp.pop %v465
        %v467 = vmul.f32 %v462, %v466
        %v468 = vpack.c.bf16 %v467, %v467
        %v469 = vld [vmem:[%s350] sm:$0xf]
        %v471 = vsel %vm437, %v468, 0
        %vm473 = vcmask 1043456
        %v475 = vsel %vm473, %v469, 0
        %477 = vmatpush.bf16.msra.mxu0 0
        %478 = vmatpush.bf16.msra.mxu0 0
        %479 = vmatpush.bf16.msra.mxu0 0
        %480 = vmatpush.bf16.msra.mxu0 0
        %481 = vmatpush.bf16.msra.mxu0 0
        %482 = vmatpush.bf16.msra.mxu0 0
        %483 = vmatpush.bf16.msra.mxu0 0
        %484 = vmatpush.bf16.msra.mxu0 %v475
        %485 = vmatmul.bf16.gmra.mxu0 %v471
        %v486 = vpop.f32.mrf.mxu0
        %v487 = vadd.f32 0.0, %v486
        %v488 = vpop.f32.mrf.mxu0
        %489 = vdwg.mxu0
        %v490 = vpack.c.bf16 %v487, %v487
        %vm491 = vcmask 60416
        %492 = vst.msk [vmem:[#allocation2] sm:$0xf] %vm491, %v490
        %s493 = scalar_lea.vmem %s340, 4 [#allocation6]
        %v494 = vld [vmem:[%s493] sm:$0xf]
        %v496 = vunpack.c.l.b16 %v435
        %v497 = vpack.c.b16 %v496, %v496
        %498 = vrot.lane.b32.xlu0 %v497, 120
        %v499 = vpop.permute.xlu0 %498
        %v501 = vsel %vm437, %v499, 0
        %v504 = vsel %vm437, %v494, 0
        %506 = vmatpush.bf16.xpose.msra.mxu0 0
        %507 = vmatpush.bf16.xpose.msra.mxu0 0
        %508 = vmatpush.bf16.xpose.msra.mxu0 0
        %509 = vmatpush.bf16.xpose.msra.mxu0 0
        %510 = vmatpush.bf16.xpose.msra.mxu0 0
        %511 = vmatpush.bf16.xpose.msra.mxu0 0
        %512 = vmatpush.bf16.xpose.msra.mxu0 0
        %513 = vmatpush.bf16.xpose.msra.mxu0 %v504
        %514 = vmatmul.bf16.gmra.mxu0 %v501
        %v515 = vpop.f32.mrf.mxu0
        %v516 = vadd.f32 0.0, %v515
        %v517 = vpop.f32.mrf.mxu0
        %518 = vdwg.mxu0
        %v519 = vsel %vm437, %v516, -inf
        %520 = vmax.xlane.f32.xlu0 %v519
        %v521 = vpop.xlane.xlu0 %520
        %v522 = vsub.f32 %v516, %v521
        %v523 = vmul.f32 %v522, 1.442695
        %v524 = vpow.pop %v523
        %v525 = vsel %vm437, %v524, 0.0
        %526 = vadd.xlane.f32.xlu0 %v525
        %v527 = vpop.xlane.xlu0 %526
        %v528 = vrcp.pop %v527
        %v529 = vmul.f32 %v524, %v528
        %v530 = vpack.c.bf16 %v529, %v529
        %s531 = scalar_lea.vmem %s350, 4 [#allocation8]
        %v532 = vld [vmem:[%s531] sm:$0xf]
        %v534 = vsel %vm437, %v530, 0
        %v537 = vsel %vm473, %v532, 0
        %539 = vmatpush.bf16.msra.mxu0 0
        %540 = vmatpush.bf16.msra.mxu0 0
        %541 = vmatpush.bf16.msra.mxu0 0
        %542 = vmatpush.bf16.msra.mxu0 0
        %543 = vmatpush.bf16.msra.mxu0 0
        %544 = vmatpush.bf16.msra.mxu0 0
        %545 = vmatpush.bf16.msra.mxu0 0
        %546 = vmatpush.bf16.msra.mxu0 %v537
        %547 = vmatmul.bf16.gmra.mxu0 %v534
        %v548 = vpop.f32.mrf.mxu0
        %v549 = vadd.f32 0.0, %v548
        %v550 = vpop.f32.mrf.mxu0
        %551 = vdwg.mxu0
        %v552 = vpack.c.bf16 %v549, %v549
        %554 = vrot.lane.b32.xlu0 %v552, 8
        %v555 = vpop.permute.xlu0 %554
        %vm557 = vcmask 126016
        %558 = vst.msk [vmem:[#allocation2] sm:$0xf] %vm557, %v555
        %s559 = scalar_lea.vmem %s340, 8 [#allocation6]
        %v560 = vld [vmem:[%s559] sm:$0xf]
        %561 = vrot.lane.b32.xlu0 %v497, 112
        %v562 = vpop.permute.xlu0 %561
        %v564 = vsel %vm437, %v562, 0
        %v567 = vsel %vm437, %v560, 0
        %569 = vmatpush.bf16.xpose.msra.mxu0 0
        %570 = vmatpush.bf16.xpose.msra.mxu0 0
        %571 = vmatpush.bf16.xpose.msra.mxu0 0
        %572 = vmatpush.bf16.xpose.msra.mxu0 0
        %573 = vmatpush.bf16.xpose.msra.mxu0 0
        %574 = vmatpush.bf16.xpose.msra.mxu0 0
        %575 = vmatpush.bf16.xpose.msra.mxu0 0
        %576 = vmatpush.bf16.xpose.msra.mxu0 %v567
        %577 = vmatmul.bf16.gmra.mxu0 %v564
        %v578 = vpop.f32.mrf.mxu0
        %v579 = vadd.f32 0.0, %v578
        %v580 = vpop.f32.mrf.mxu0
        %581 = vdwg.mxu0
        %v582 = vsel %vm437, %v579, -inf
        %583 = vmax.xlane.f32.xlu0 %v582
        %v584 = vpop.xlane.xlu0 %583
        %v585 = vsub.f32 %v579, %v584
        %v586 = vmul.f32 %v585, 1.442695
        %v587 = vpow.pop %v586
        %v588 = vsel %vm437, %v587, 0.0
        %589 = vadd.xlane.f32.xlu0 %v588
        %v590 = vpop.xlane.xlu0 %589
        %v591 = vrcp.pop %v590
        %v592 = vmul.f32 %v587, %v591
        %v593 = vpack.c.bf16 %v592, %v592
        %s594 = scalar_lea.vmem %s350, 8 [#allocation8]
        %v595 = vld [vmem:[%s594] sm:$0xf]
        %v597 = vsel %vm437, %v593, 0
        %v600 = vsel %vm473, %v595, 0
        %602 = vmatpush.bf16.msra.mxu0 0
        %603 = vmatpush.bf16.msra.mxu0 0
        %604 = vmatpush.bf16.msra.mxu0 0
        %605 = vmatpush.bf16.msra.mxu0 0
        %606 = vmatpush.bf16.msra.mxu0 0
        %607 = vmatpush.bf16.msra.mxu0 0
        %608 = vmatpush.bf16.msra.mxu0 0
        %609 = vmatpush.bf16.msra.mxu0 %v600
        %610 = vmatmul.bf16.gmra.mxu0 %v597
        %v611 = vpop.f32.mrf.mxu0
        %v612 = vadd.f32 0.0, %v611
        %v613 = vpop.f32.mrf.mxu0
        %614 = vdwg.mxu0
        %v615 = vpack.c.bf16 %v612, %v612
        %617 = vrot.lane.b32.xlu0 %v615, 16
        %v618 = vpop.permute.xlu0 %617
        %vm620 = vcmask 191616
        %621 = vst.msk [vmem:[#allocation2] sm:$0xf] %vm620, %v618
        %s622 = scalar_lea.vmem %s340, 12 [#allocation6]
        %v623 = vld [vmem:[%s622] sm:$0xf]
        %624 = vrot.lane.b32.xlu0 %v497, 104
        %v625 = vpop.permute.xlu0 %624
        %v627 = vsel %vm437, %v625, 0
        %v630 = vsel %vm437, %v623, 0
        %632 = vmatpush.bf16.xpose.msra.mxu0 0
        %633 = vmatpush.bf16.xpose.msra.mxu0 0
        %634 = vmatpush.bf16.xpose.msra.mxu0 0
        %635 = vmatpush.bf16.xpose.msra.mxu0 0
        %636 = vmatpush.bf16.xpose.msra.mxu0 0
        %637 = vmatpush.bf16.xpose.msra.mxu0 0
        %638 = vmatpush.bf16.xpose.msra.mxu0 0
        %639 = vmatpush.bf16.xpose.msra.mxu0 %v630
        %640 = vmatmul.bf16.gmra.mxu0 %v627
        %v641 = vpop.f32.mrf.mxu0
        %v642 = vadd.f32 0.0, %v641
        %v643 = vpop.f32.mrf.mxu0
        %644 = vdwg.mxu0
        %v645 = vsel %vm437, %v642, -inf
        %646 = vmax.xlane.f32.xlu0 %v645
        %v647 = vpop.xlane.xlu0 %646
        %v648 = vsub.f32 %v642, %v647
        %v649 = vmul.f32 %v648, 1.442695
        %v650 = vpow.pop %v649
        %v651 = vsel %vm437, %v650, 0.0
        %652 = vadd.xlane.f32.xlu0 %v651
        %v653 = vpop.xlane.xlu0 %652
        %v654 = vrcp.pop %v653
        %v655 = vmul.f32 %v650, %v654
        %v656 = vpack.c.bf16 %v655, %v655
        %s657 = scalar_lea.vmem %s350, 12 [#allocation8]
        %v658 = vld [vmem:[%s657] sm:$0xf]
        %v660 = vsel %vm437, %v656, 0
        %v663 = vsel %vm473, %v658, 0
        %665 = vmatpush.bf16.msra.mxu0 0
        %666 = vmatpush.bf16.msra.mxu0 0
        %667 = vmatpush.bf16.msra.mxu0 0
        %668 = vmatpush.bf16.msra.mxu0 0
        %669 = vmatpush.bf16.msra.mxu0 0
        %670 = vmatpush.bf16.msra.mxu0 0
        %671 = vmatpush.bf16.msra.mxu0 0
        %672 = vmatpush.bf16.msra.mxu0 %v663
        %673 = vmatmul.bf16.gmra.mxu0 %v660
        %v674 = vpop.f32.mrf.mxu0
        %v675 = vadd.f32 0.0, %v674
        %v676 = vpop.f32.mrf.mxu0
        %677 = vdwg.mxu0
        %v678 = vpack.c.bf16 %v675, %v675
        %680 = vrot.lane.b32.xlu0 %v678, 24
        %v681 = vpop.permute.xlu0 %680
        %vm683 = vcmask 257216
        %684 = vst.msk [vmem:[#allocation2] sm:$0xf] %vm683, %v681
        %v685 = vld [vmem:[#allocation2] sm:$0xf]
        %v686 = vld [vmem:[#allocation11] sm:$0xf]
        %v687 = vld [vmem:[#allocation11 + $0x4] sm:$0xf]
        %v688 = vld [vmem:[#allocation11 + $0x8] sm:$0xf]
        %v689 = vld [vmem:[#allocation11 + $0xc] sm:$0xf]
        %v690 = vld [vmem:[%s5] sm:$0x1]
        %v692 = vperm.slane %v690, 0
        %v698 = vunpack.c.l.b16 %v686
        %v699 = vunpack.c.l.b16 %v687
        %v700 = vunpack.c.l.b16 %v688
        %v701 = vunpack.c.l.b16 %v689
        %v702 = vpack.c.b16 %v699, %v698
        %v703 = vpack.c.b16 %v701, %v700
        %v707 = vsel %vm418, %v685, 0
        %709 = vmatpush.bf16.msra.mxu0 0
        %710 = vmatpush.bf16.msra.mxu0 0
        %711 = vmatpush.bf16.msra.mxu0 0
        %712 = vmatpush.bf16.msra.mxu0 0
        %713 = vmatpush.bf16.msra.mxu0 0
        %714 = vmatpush.bf16.msra.mxu0 0
        %715 = vmatpush.bf16.msra.mxu0 %v703
        %716 = vmatpush.bf16.msra.mxu0 %v702
        %717 = vmatmul.bf16.gmra.mxu0 %v707
        %v718 = vpop.f32.mrf.mxu0
        %v719 = vadd.f32 %v692, %v718
        %v720 = vpop.f32.mrf.mxu0
        %721 = vdwg.mxu0
        %722 = vst.msk [vmem:[%s399] sm:$0xff] %vm418, %v719
        %s723 = sand.u32 %s192, 1
        %s724 = scalar_lea.sflag [#allocation5], %s723
        %s725 = sand.u32 %s192, 1
        %s726 = smul.addr %s725, 8
        %s727 = scalar_lea.vmem [#allocation12], %s726
        // Predicated region
        $region65: #{tpu_custom_call.1} parent=43 // pred_check
          %p728 = pneg %p202
        $region66: #{tpu_custom_call.1} parent=43 // pred_check_branch
          %730 = sbr.rel (%p728) target = $region68
        $region67: #{tpu_custom_call.1} parent=43 // pred_region
          %732 = vsyncadd %s724, 0
          %s733 = sadd.s32 %s32, %s31
          %s734 = smul.addr %s733, 8
          %s735 = scalar_lea.hbm %s6, %s734
          %s737 = sshll.u32 %s727, 4
          %s738 = int_to_ptr.vmem [resolvable:$true] %s737
          %s739 = sshll.u32 %s735, 4
          %s740 = int_to_ptr.hbm [resolvable:$true] %s739
          %742 = dma.vmem_to_hbm [thread:$0]  %s738, 128, %s740, %s724
        $region68: #{tpu_custom_call.1} parent=43 // pred_fallthru
          _
      $region44: #{tpu_custom_call.1} parent=5 // pred_fallthru
        _
      %p743 = scmp.le.s32.totalorder 2, %s22
      // Predicated region
      $region69: #{tpu_custom_call.1} parent=5 // pred_check
        %p744 = pneg %p743
      $region70: #{tpu_custom_call.1} parent=5 // pred_check_branch
        %746 = sbr.rel (%p744) target = $region72
      $region71: #{tpu_custom_call.1} parent=5 // pred_region
        %s747 = ssub.s32 %s22, 2
        // Predicated region
        $region73: #{tpu_custom_call.1} parent=71 // pred_check
          %p748 = pneg %p208
        $region74: #{tpu_custom_call.1} parent=71 // pred_check_branch
          %750 = sbr.rel (%p748) target = $region76
        $region75: #{tpu_custom_call.1} parent=71 // pred_region
          %s751 = sand.u32 %s193, 1
          %s752 = scalar_lea.sflag [#allocation5], %s751
          %s753 = sand.u32 %s193, 1
          %s754 = smul.addr %s753, 8
          %s755 = scalar_lea.vmem [#allocation12], %s754
          %757 = dma.done %s752, 128
        $region76: #{tpu_custom_call.1} parent=71 // pred_fallthru
          _
      $region72: #{tpu_custom_call.1} parent=5 // pred_fallthru
        _
    $region6: #{tpu_custom_call.1} parent=1 // loop_footer
      %s26 = sadd.s32 1, %s22
    $region7: #{tpu_custom_call.1} parent=1 // loop_footer_branch
      %21 = sbr.rel target = $region3
    $region8: #{tpu_custom_call.1} parent=1 // loop_exit
      _
    %758 = vsyncpa [#allocation4], 1
    %s759 = scalar_lea.sflag [#allocation4], 1
    %760 = vsyncpa %s759, 1
    %761 = vsyncpa [#allocation7], 1
    %s762 = scalar_lea.sflag [#allocation7], 1
    %763 = vsyncpa %s762, 1
    %764 = vsyncpa [#allocation10], 1
    %765 = vsyncpa [#allocation5], 1
    %s766 = scalar_lea.sflag [#allocation5], 1
    %767 = vsyncpa %s766, 1

</llo_original>
